<compile_context>
chip_gen: v5e
topology: v5e:2x2
jax: 0.10.0
libtpu: 0.0.40
codegen_flags: <defaults>
</compile_context>

<pallas_src>
import functools

import jax
import jax.numpy as jnp
from jax.experimental import pallas as pl
from jax.experimental.pallas import tpu as pltpu

NA_PAD = 128          # lane-dense padded action dimension
MAX_TM = 512          # max rows per batch tile (per measured mem-bound sweep)
NEG_BIG = -1.0e30     # finite "minus infinity" for masking padded lanes


def policy_kernel(x_ref, w1_ref, b1_ref, w2_ref, b2_ref, o_ref, *, n_actions):
    # fc1 + bias + ReLU (b1 added in-kernel; broadcast-add is free VPU filler).
    h = jnp.dot(x_ref[...], w1_ref[...], preferred_element_type=jnp.float32)
    h = jnp.maximum(h + b1_ref[...], 0.0)
    # fc2 (lane-padded to 128 output columns) + bias.
    logits = jnp.dot(h, w2_ref[...], preferred_element_type=jnp.float32) + b2_ref[...]
    # Mask padded action lanes with a large negative finite value so their
    # exp underflows to exactly 0 (no -inf arithmetic).
    col = jax.lax.broadcasted_iota(jnp.int32, logits.shape, 1)
    logits = jnp.where(col < n_actions, logits, NEG_BIG)
    # Numerically-stable softmax over the last axis (matches nn.Softmax on 2-D).
    m = jnp.max(logits, axis=-1, keepdims=True)
    e = jnp.exp(logits - m)
    s = jnp.sum(e, axis=-1, keepdims=True)
    # Exact divide: rows sum to 1 within f32 rounding (kernel is store-bound,
    # so the exact reciprocal costs nothing vs the approximate EUP one).
    o_ref[...] = e / s


def prepare_params(w1, b1, w2, b2):
    """Repack PyTorch-style params into the kernel's layout.

    w1: (obs_dim, hidden), b1: (hidden,) or (1, hidden)
    w2: (hidden, n_actions), b2: (n_actions,) or (1, n_actions)
    Returns (w1, b1_2d, w2_pad, b2_pad) with the action dim padded to NA_PAD.
    """
    w1 = jnp.asarray(w1, jnp.float32)
    b1 = jnp.asarray(b1, jnp.float32).reshape(1, -1)
    w2 = jnp.asarray(w2, jnp.float32)
    b2 = jnp.asarray(b2, jnp.float32).reshape(1, -1)
    hidden, n_actions = w2.shape
    w2_pad = jnp.zeros((hidden, NA_PAD), jnp.float32).at[:, :n_actions].set(w2)
    b2_pad = jnp.zeros((1, NA_PAD), jnp.float32).at[:, :n_actions].set(b2)
    return w1, b1, w2_pad, b2_pad


def _round_up(x, m):
    return ((x + m - 1) // m) * m


def _choose_tile_rows(T):
    """Batch-tile rows: 8 for single-obs/tiny batches, otherwise as large as
    possible (up to MAX_TM) while keeping a >=2-step grid for moderate T so a
    v7x chip's second TensorCore is not left idle."""
    if T <= 16:
        return max(_round_up(T, 8), 8)
    return min(MAX_TM, _round_up(pl.cdiv(T, 2), 8))


def policy_net_forward_batch(xs, w1, b1, w2_pad, b2_pad, n_actions,
                             *, slice_output=True):
    """xs: (T, obs_dim) float32 -> action probabilities.

    slice_output=True  -> (T, n_actions) (convenience / PyTorch-like layout)
    slice_output=False -> (t_pad, NA_PAD) lane-dense padded layout; the valid
                          region is out[:T, :n_actions].  Preferred for
                          rollout consumers: avoids re-reading the whole
                          padded store just to slice out 3 columns.
    """
    xs = jnp.asarray(xs, jnp.float32)
    T, obs_dim = xs.shape
    hidden = w1.shape[1]

    tm = _choose_tile_rows(T)
    nt = pl.cdiv(T, tm)
    t_pad = nt * tm
    if t_pad != T:
        xs = jnp.pad(xs, ((0, t_pad - T), (0, 0)))

    out = pl.pallas_call(
        functools.partial(policy_kernel, n_actions=n_actions),
        out_shape=jax.ShapeDtypeStruct((t_pad, NA_PAD), jnp.float32),
        grid=(nt,),
        in_specs=[
            pl.BlockSpec((tm, obs_dim), lambda t: (t, 0)),       # x tile
            pl.BlockSpec((obs_dim, hidden), lambda t: (0, 0)),   # W1 (resident)
            pl.BlockSpec((1, hidden), lambda t: (0, 0)),         # b1 (resident)
            pl.BlockSpec((hidden, NA_PAD), lambda t: (0, 0)),    # W2 (resident)
            pl.BlockSpec((1, NA_PAD), lambda t: (0, 0)),         # b2 (resident)
        ],
        out_specs=pl.BlockSpec((tm, NA_PAD), lambda t: (t, 0)),
        compiler_params=pltpu.CompilerParams(
            dimension_semantics=("parallel",)
        ),
    )(xs, w1, b1, w2_pad, b2_pad)

    if slice_output:
        return out[:T, :n_actions]
    return out


def policy_net_forward(x, w1, b1, w2_pad, b2_pad, n_actions):
    """Single-observation path matching PyTorch forward: x -> view(1,-1) -> probs.

    Uses an 8-row tile (via the adaptive tile chooser) rather than padding a
    single observation up to a 128-row tile.
    """
    x = jnp.asarray(x, jnp.float32).reshape(1, -1)
    return policy_net_forward_batch(x, w1, b1, w2_pad, b2_pad, n_actions,
                                    slice_output=True)


def init_params(key, obs_dim, n_actions, hidden=256):
    """Deterministic init mimicking PyTorch Linear default (U[-1/sqrt(fan_in), ...])."""
    k1, k2, k3, k4 = jax.random.split(key, 4)
    bound1 = 1.0 / jnp.sqrt(obs_dim)
    bound2 = 1.0 / jnp.sqrt(hidden)
    w1 = jax.random.uniform(k1, (obs_dim, hidden), jnp.float32, -bound1, bound1)
    b1 = jax.random.uniform(k2, (1, hidden), jnp.float32, -bound1, bound1)
    w2 = jax.random.uniform(k3, (hidden, n_actions), jnp.float32, -bound2, bound2)
    b2 = jax.random.uniform(k4, (1, n_actions), jnp.float32, -bound2, bound2)
    return w1, b1, w2, b2


if __name__ == "__main__":
    # Acrobot-v1: observation dim 6, 3 discrete actions, 256 hidden (per module).
    OBS_DIM, N_ACTIONS, HIDDEN = 6, 3, 256
    T = 300  # batched rollout; exercises row padding and a 2-step "parallel" grid

    key = jax.random.PRNGKey(0)
    kx, kp = jax.random.split(key)
    xs = jax.random.normal(kx, (T, OBS_DIM), jnp.float32)
    w1, b1, w2, b2 = init_params(kp, OBS_DIM, N_ACTIONS, HIDDEN)
    w1_p, b1_p, w2_pad, b2_pad = prepare_params(w1, b1, w2, b2)

    # Batched forward through the kernel; take the padded layout (production
    # path) and slice once here only for the correctness comparison.
    out_pad = policy_net_forward_batch(xs, w1_p, b1_p, w2_pad, b2_pad,
                                       N_ACTIONS, slice_output=False)
    out_pad = jax.block_until_ready(out_pad)
    probs = out_pad[:T, :N_ACTIONS]

    # Pure-JAX reference (same math as the PyTorch module).
    ref_h = jnp.maximum(xs @ w1 + b1, 0.0)
    ref = jax.nn.softmax(ref_h @ w2 + b2, axis=-1)

    assert probs.shape == (T, N_ACTIONS)
    assert jnp.allclose(jnp.sum(probs, axis=-1), 1.0, atol=1e-3)
    assert jnp.allclose(probs, ref, atol=2e-3, rtol=2e-3)

    # Single-observation path (exactly the PyTorch forward semantics: B=1).
    p1 = policy_net_forward(xs[0], w1_p, b1_p, w2_pad, b2_pad, N_ACTIONS)
    p1 = jax.block_until_ready(p1)
    assert p1.shape == (1, N_ACTIONS)
    assert jnp.allclose(jnp.sum(p1, axis=-1), 1.0, atol=1e-3)
    assert jnp.allclose(p1, ref[0:1], atol=2e-3, rtol=2e-3)

    print("KERNEL_OK")
</pallas_src>

<mosaic_0001>
module attributes {stable_mosaic.version = 11 : i64} {
  func.func @policy_kernel(%arg0: i32, %arg1: memref<152x6xf32, #tpu.memory_space<vmem>>, %arg2: memref<6x256xf32, #tpu.memory_space<vmem>>, %arg3: memref<1x256xf32, #tpu.memory_space<vmem>>, %arg4: memref<256x128xf32, #tpu.memory_space<vmem>>, %arg5: memref<1x128xf32, #tpu.memory_space<vmem>>, %arg6: memref<152x128xf32, #tpu.memory_space<vmem>>) attributes {dimension_semantics = [#tpu.dimension_semantics<parallel>], iteration_bounds = array<i64: 2>, scalar_prefetch = 0 : i64, scratch_operands = 0 : i64, tpu.core_type = #tpu.core_type<tc>, window_params = [{transform_indices = @transform_0, window_bounds = array<i64: 152, 6>}, {pipeline_mode = #tpu.pipeline_mode<synchronous>, transform_indices = @transform_1, window_bounds = array<i64: 6, 256>}, {pipeline_mode = #tpu.pipeline_mode<synchronous>, transform_indices = @transform_2, window_bounds = array<i64: 1, 256>}, {pipeline_mode = #tpu.pipeline_mode<synchronous>, transform_indices = @transform_3, window_bounds = array<i64: 256, 128>}, {pipeline_mode = #tpu.pipeline_mode<synchronous>, transform_indices = @transform_4, window_bounds = array<i64: 1, 128>}, {transform_indices = @transform_5, window_bounds = array<i64: 152, 128>}]} {
    %c0 = arith.constant 0 : index
    %c0_0 = arith.constant 0 : index
    %0 = vector.load %arg1[%c0, %c0_0] : memref<152x6xf32, #tpu.memory_space<vmem>>, vector<152x6xf32>
    %c0_1 = arith.constant 0 : index
    %c0_2 = arith.constant 0 : index
    %1 = vector.load %arg2[%c0_1, %c0_2] : memref<6x256xf32, #tpu.memory_space<vmem>>, vector<6x256xf32>
    %cst = arith.constant dense<0.000000e+00> : vector<152x256xf32>
    %2 = tpu.matmul %0, %1, %cst {dimension_numbers = #tpu.dot_dimension_numbers<[1], [0], [0], [1], [0, 0, 1, 1], [], []>} : vector<152x6xf32>, vector<6x256xf32>, vector<152x256xf32> -> vector<152x256xf32>
    %c0_3 = arith.constant 0 : index
    %c0_4 = arith.constant 0 : index
    %3 = vector.load %arg3[%c0_3, %c0_4] : memref<1x256xf32, #tpu.memory_space<vmem>>, vector<1x256xf32>
    %4 = vector.broadcast %3 : vector<1x256xf32> to vector<152x256xf32>
    %5 = arith.addf %2, %4 : vector<152x256xf32>
    %cst_5 = arith.constant 0.000000e+00 : f32
    %6 = vector.broadcast %cst_5 : f32 to vector<152x256xf32>
    %7 = arith.maximumf %5, %6 : vector<152x256xf32>
    %c0_6 = arith.constant 0 : index
    %c0_7 = arith.constant 0 : index
    %8 = vector.load %arg4[%c0_6, %c0_7] : memref<256x128xf32, #tpu.memory_space<vmem>>, vector<256x128xf32>
    %cst_8 = arith.constant dense<0.000000e+00> : vector<152x128xf32>
    %9 = tpu.matmul %7, %8, %cst_8 {dimension_numbers = #tpu.dot_dimension_numbers<[1], [0], [0], [1], [0, 0, 1, 1], [], []>} : vector<152x256xf32>, vector<256x128xf32>, vector<152x128xf32> -> vector<152x128xf32>
    %c0_9 = arith.constant 0 : index
    %c0_10 = arith.constant 0 : index
    %10 = vector.load %arg5[%c0_9, %c0_10] : memref<1x128xf32, #tpu.memory_space<vmem>>, vector<1x128xf32>
    %11 = vector.broadcast %10 : vector<1x128xf32> to vector<152x128xf32>
    %12 = arith.addf %9, %11 : vector<152x128xf32>
    %13 = tpu.iota {dimensions = array<i32: 1>} : vector<152x128xi32>
    %c3_i32 = arith.constant 3 : i32
    %14 = vector.broadcast %c3_i32 : i32 to vector<152x128xi32>
    %15 = arith.cmpi slt, %13, %14 : vector<152x128xi32>
    %cst_11 = arith.constant -1.000000e+30 : f32
    %16 = vector.broadcast %cst_11 : f32 to vector<152x128xf32>
    %17 = arith.select %15, %12, %16 : vector<152x128xi1>, vector<152x128xf32>
    %cst_12 = arith.constant dense<0xFF800000> : vector<152xf32>
    %18 = vector.multi_reduction <maximumf>, %17, %cst_12 [1] : vector<152x128xf32> to vector<152xf32>
    %19 = vector.shape_cast %18 : vector<152xf32> to vector<152x1xf32>
    %20 = vector.broadcast %19 : vector<152x1xf32> to vector<152x128xf32>
    %21 = arith.subf %17, %20 : vector<152x128xf32>
    %22 = math.exp %21 : vector<152x128xf32>
    %cst_13 = arith.constant dense<0.000000e+00> : vector<152xf32>
    %23 = vector.multi_reduction <add>, %22, %cst_13 [1] : vector<152x128xf32> to vector<152xf32>
    %24 = vector.shape_cast %23 : vector<152xf32> to vector<152x1xf32>
    %25 = vector.broadcast %24 : vector<152x1xf32> to vector<152x128xf32>
    %26 = arith.divf %22, %25 : vector<152x128xf32>
    %c0_14 = arith.constant 0 : index
    %c0_15 = arith.constant 0 : index
    %27 = vector.load %arg6[%c0_14, %c0_15] : memref<152x128xf32, #tpu.memory_space<vmem>>, vector<152x128xf32>
    tpu.vector_store %arg6[%c0_14, %c0_15], %26 {strides = array<i32>} : memref<152x128xf32, #tpu.memory_space<vmem>>, vector<152x128xf32>,
    return
  }
  func.func @transform_0(%arg0: i32) -> (i32, i32) {
    %c0_i32 = arith.constant 0 : i32
    %c0_i32_0 = arith.constant 0 : i32
    return %arg0, %c0_i32 : i32, i32
  }
  func.func @transform_1(%arg0: i32) -> (i32, i32) {
    %c0_i32 = arith.constant 0 : i32
    %c0_i32_0 = arith.constant 0 : i32
    %c0_i32_1 = arith.constant 0 : i32
    return %c0_i32, %c0_i32_0 : i32, i32
  }
  func.func @transform_2(%arg0: i32) -> (i32, i32) {
    %c0_i32 = arith.constant 0 : i32
    %c0_i32_0 = arith.constant 0 : i32
    %c0_i32_1 = arith.constant 0 : i32
    return %c0_i32, %c0_i32_0 : i32, i32
  }
  func.func @transform_3(%arg0: i32) -> (i32, i32) {
    %c0_i32 = arith.constant 0 : i32
    %c0_i32_0 = arith.constant 0 : i32
    %c0_i32_1 = arith.constant 0 : i32
    return %c0_i32, %c0_i32_0 : i32, i32
  }
  func.func @transform_4(%arg0: i32) -> (i32, i32) {
    %c0_i32 = arith.constant 0 : i32
    %c0_i32_0 = arith.constant 0 : i32
    %c0_i32_1 = arith.constant 0 : i32
    return %c0_i32, %c0_i32_0 : i32, i32
  }
  func.func @transform_5(%arg0: i32) -> (i32, i32) {
    %c0_i32 = arith.constant 0 : i32
    %c0_i32_0 = arith.constant 0 : i32
    return %arg0, %c0_i32 : i32, i32
  }
}

</mosaic_0001>

<llo_original>
// kernel: tpu_custom_call.1
$region0: #{tpu_custom_call.1}
  #allocation0 [shape = 'u32[]', space=smem, size = 0x4, offset = 0x4, fixed_abs, tag = 'smem constant byte address 0x4 - core index']
  #allocation1 [shape = 'u32[72,128]{1,0:T(1,128)}', space=vmem, size = 0x9000, scoped, tag = 'internal scratch']
  %s0 = inlined_call_operand.vmem [shape: f32[304,6], index: 0, kind: input, shape index: {}]
  %s1 = inlined_call_operand.vmem [shape: f32[6,256], index: 1, kind: input, shape index: {}]
  %s2 = inlined_call_operand.vmem [shape: f32[1,256], index: 2, kind: input, shape index: {}]
  %s3 = inlined_call_operand.vmem [shape: f32[256,128], index: 3, kind: input, shape index: {}]
  %s4 = inlined_call_operand.vmem [shape: f32[1,128], index: 4, kind: input, shape index: {}]
  %s5 = inlined_call_operand.hbm [shape: f32[304,128], index: 5, kind: output, shape index: {}]
  %s6 = sld [smem:[#allocation0]]
  $region53: #{tpu_custom_call.1} parent=0
    _
  %s8 = ssub.s32 1, %s6
  %s9 = scalar_select 0, %s8, %s6
  $region1: #{tpu_custom_call.1} parent=0
    #allocation2 [shape = 'u8[155648]{0}', space=vmem, size = 0x26000, scoped, tag = 'output window, operand 0']
    #allocation3 [shape = 's32[2]{0}', space=sflag, size = 0x8, scoped, tag = 'scoped memory for tpu_custom_call.1']
    %10 = vsyncpa [#allocation3], 0
    %s11 = scalar_lea.sflag [#allocation3], 1
    %12 = vsyncpa %s11, 0
    loop: start=0, step=1, limit=4
    $region2: #{tpu_custom_call.1} parent=1 // loop_pre_header
      _
    $region3: #{tpu_custom_call.1} parent=1 // loop_header
      %s14 = sphi 0, %s18
      %p15 = scmp.ge.s32.totalorder %s14, 4
      %s24 = sphi 0, %s26
      %s27 = sphi 0, %s24
      %s28 = sphi 0, %s27
      %s44 = sphi 0, %s28
      %s48 = sphi 0, %s48
      %s50 = sphi 0, %s48
      %s51 = sphi 0, %s50
      %s65 = sphi 0, %s51
      %s69 = sphi 0, %s69
      %s71 = sphi 0, %s69
      %s72 = sphi 0, %s71
      %s86 = sphi 0, %s72
      %s90 = sphi 0, %s90
      %s92 = sphi 0, %s90
      %s93 = sphi 0, %s92
      %s107 = sphi 0, %s93
      %s111 = sphi 0, %s111
      %s113 = sphi 0, %s111
      %s114 = sphi 0, %s113
      %s128 = sphi 0, %s114
      %s134 = sphi 0, %s136
      %s137 = sphi 0, %s134
      %s138 = sphi 0, %s137
      %s154 = sphi 0, %s138
    $region4: #{tpu_custom_call.1} parent=1 // loop_header_branch
      %17 = sbr.rel (%p15) target = $region8
    $region5: #{tpu_custom_call.1} parent=1 // loop_body
      %s19 = ssub.s32 %s14, 1
      %s20 = ssub.s32 %s14, 2
      %s21 = sadd.s32 %s14, 1
      %s22 = ssub.s32 %s14, %s21
      %p23 = scmp.eq.s32.totalorder %s22, 0
      %s25 = sadd.s32 %s24, 1
      %s26 = scalar_select %p23, %s24, %s25
      %p29 = pneg %p23
      %p30 = scmp.eq.s32.totalorder %s14, 1
      %p31 = por %p29, %p30
      %p32 = scmp.ne.s32.totalorder %s24, %s27
      %p33 = scmp.eq.s32.totalorder %s14, 0
      %p34 = por %p32, %p33
      %p35 = scmp.ne.s32.totalorder %s24, %s27
      %p36 = scmp.eq.s32.totalorder %s19, 1
      %p37 = por %p35, %p36
      %p38 = scmp.ne.s32.totalorder %s27, %s28
      %p39 = scmp.eq.s32.totalorder %s19, 0
      %p40 = por %p38, %p39
      %p41 = scmp.ne.s32.totalorder %s27, %s28
      %p42 = scmp.eq.s32.totalorder %s20, 1
      %p43 = por %p41, %p42
      %p45 = scmp.ne.s32.totalorder %s28, %s44
      %p46 = scmp.eq.s32.totalorder %s20, 0
      %p47 = por %p45, %p46
      %s49 = sadd.s32 %s48, 1
      %p52 = scmp.eq.s32.totalorder %s14, 1
      %p53 = scmp.ne.s32.totalorder %s48, %s50
      %p54 = scmp.eq.s32.totalorder %s14, 0
      %p55 = por %p53, %p54
      %p56 = scmp.ne.s32.totalorder %s48, %s50
      %p57 = scmp.eq.s32.totalorder %s19, 1
      %p58 = por %p56, %p57
      %p59 = scmp.ne.s32.totalorder %s50, %s51
      %p60 = scmp.eq.s32.totalorder %s19, 0
      %p61 = por %p59, %p60
      %p62 = scmp.ne.s32.totalorder %s50, %s51
      %p63 = scmp.eq.s32.totalorder %s20, 1
      %p64 = por %p62, %p63
      %p66 = scmp.ne.s32.totalorder %s51, %s65
      %p67 = scmp.eq.s32.totalorder %s20, 0
      %p68 = por %p66, %p67
      %s70 = sadd.s32 %s69, 1
      %p73 = scmp.eq.s32.totalorder %s14, 1
      %p74 = scmp.ne.s32.totalorder %s69, %s71
      %p75 = scmp.eq.s32.totalorder %s14, 0
      %p76 = por %p74, %p75
      %p77 = scmp.ne.s32.totalorder %s69, %s71
      %p78 = scmp.eq.s32.totalorder %s19, 1
      %p79 = por %p77, %p78
      %p80 = scmp.ne.s32.totalorder %s71, %s72
      %p81 = scmp.eq.s32.totalorder %s19, 0
      %p82 = por %p80, %p81
      %p83 = scmp.ne.s32.totalorder %s71, %s72
      %p84 = scmp.eq.s32.totalorder %s20, 1
      %p85 = por %p83, %p84
      %p87 = scmp.ne.s32.totalorder %s72, %s86
      %p88 = scmp.eq.s32.totalorder %s20, 0
      %p89 = por %p87, %p88
      %s91 = sadd.s32 %s90, 1
      %p94 = scmp.eq.s32.totalorder %s14, 1
      %p95 = scmp.ne.s32.totalorder %s90, %s92
      %p96 = scmp.eq.s32.totalorder %s14, 0
      %p97 = por %p95, %p96
      %p98 = scmp.ne.s32.totalorder %s90, %s92
      %p99 = scmp.eq.s32.totalorder %s19, 1
      %p100 = por %p98, %p99
      %p101 = scmp.ne.s32.totalorder %s92, %s93
      %p102 = scmp.eq.s32.totalorder %s19, 0
      %p103 = por %p101, %p102
      %p104 = scmp.ne.s32.totalorder %s92, %s93
      %p105 = scmp.eq.s32.totalorder %s20, 1
      %p106 = por %p104, %p105
      %p108 = scmp.ne.s32.totalorder %s93, %s107
      %p109 = scmp.eq.s32.totalorder %s20, 0
      %p110 = por %p108, %p109
      %s112 = sadd.s32 %s111, 1
      %p115 = scmp.eq.s32.totalorder %s14, 1
      %p116 = scmp.ne.s32.totalorder %s111, %s113
      %p117 = scmp.eq.s32.totalorder %s14, 0
      %p118 = por %p116, %p117
      %p119 = scmp.ne.s32.totalorder %s111, %s113
      %p120 = scmp.eq.s32.totalorder %s19, 1
      %p121 = por %p119, %p120
      %p122 = scmp.ne.s32.totalorder %s113, %s114
      %p123 = scmp.eq.s32.totalorder %s19, 0
      %p124 = por %p122, %p123
      %p125 = scmp.ne.s32.totalorder %s113, %s114
      %p126 = scmp.eq.s32.totalorder %s20, 1
      %p127 = por %p125, %p126
      %p129 = scmp.ne.s32.totalorder %s114, %s128
      %p130 = scmp.eq.s32.totalorder %s20, 0
      %p131 = por %p129, %p130
      %s132 = ssub.s32 %s14, %s21
      %p133 = scmp.eq.s32.totalorder %s132, 0
      %s135 = sadd.s32 %s134, 1
      %s136 = scalar_select %p133, %s134, %s135
      %p139 = pneg %p133
      %p140 = scmp.eq.s32.totalorder %s14, 1
      %p141 = por %p139, %p140
      %p142 = scmp.ne.s32.totalorder %s134, %s137
      %p143 = scmp.eq.s32.totalorder %s14, 0
      %p144 = por %p142, %p143
      %p145 = scmp.ne.s32.totalorder %s134, %s137
      %p146 = scmp.eq.s32.totalorder %s19, 1
      %p147 = por %p145, %p146
      %p148 = scmp.ne.s32.totalorder %s137, %s138
      %p149 = scmp.eq.s32.totalorder %s19, 0
      %p150 = por %p148, %p149
      %p151 = scmp.ne.s32.totalorder %s137, %s138
      %p152 = scmp.eq.s32.totalorder %s20, 1
      %p153 = por %p151, %p152
      %p155 = scmp.ne.s32.totalorder %s138, %s154
      %p156 = scmp.eq.s32.totalorder %s20, 0
      %p157 = por %p155, %p156
      %p158 = scmp.le.s32.totalorder 1, %s14
      %p159 = scmp.lt.s32.totalorder %s14, 3
      %p160 = pnand %p158, %p159
      %p161 = pneg %p160
      // Predicated region
      $region9: #{tpu_custom_call.1} parent=5 // pred_check
        _
      $region10: #{tpu_custom_call.1} parent=5 // pred_check_branch
        %163 = sbr.rel (%p160) target = $region12
      $region11: #{tpu_custom_call.1} parent=5 // pred_region
        %s164 = ssub.s32 %s14, 1
        // Predicated region
        $region13: #{tpu_custom_call.1} parent=11 // pred_check
          %p165 = pneg %p61
        $region14: #{tpu_custom_call.1} parent=11 // pred_check_branch
          %167 = sbr.rel (%p165) target = $region16
        $region15: #{tpu_custom_call.1} parent=11 // pred_region
          _
        $region16: #{tpu_custom_call.1} parent=11 // pred_fallthru
          _
        // Predicated region
        $region17: #{tpu_custom_call.1} parent=11 // pred_check
          %p168 = pneg %p82
        $region18: #{tpu_custom_call.1} parent=11 // pred_check_branch
          %170 = sbr.rel (%p168) target = $region20
        $region19: #{tpu_custom_call.1} parent=11 // pred_region
          _
        $region20: #{tpu_custom_call.1} parent=11 // pred_fallthru
          _
        // Predicated region
        $region21: #{tpu_custom_call.1} parent=11 // pred_check
          %p171 = pneg %p103
        $region22: #{tpu_custom_call.1} parent=11 // pred_check_branch
          %173 = sbr.rel (%p171) target = $region24
        $region23: #{tpu_custom_call.1} parent=11 // pred_region
          _
        $region24: #{tpu_custom_call.1} parent=11 // pred_fallthru
          _
        // Predicated region
        $region25: #{tpu_custom_call.1} parent=11 // pred_check
          %p174 = pneg %p124
        $region26: #{tpu_custom_call.1} parent=11 // pred_check_branch
          %176 = sbr.rel (%p174) target = $region28
        $region27: #{tpu_custom_call.1} parent=11 // pred_region
          _
        $region28: #{tpu_custom_call.1} parent=11 // pred_fallthru
          _
      $region12: #{tpu_custom_call.1} parent=5 // pred_fallthru
        _
      %p177 = scmp.lt.s32.totalorder %s14, 2
      // Predicated region
      $region29: #{tpu_custom_call.1} parent=5 // pred_check
        %p178 = pneg %p177
      $region30: #{tpu_custom_call.1} parent=5 // pred_check_branch
        %180 = sbr.rel (%p178) target = $region32
      $region31: #{tpu_custom_call.1} parent=5 // pred_region
        // Predicated region
        $region33: #{tpu_custom_call.1} parent=31 // pred_check
          %p181 = pneg %p34
        $region34: #{tpu_custom_call.1} parent=31 // pred_check_branch
          %183 = sbr.rel (%p181) target = $region36
        $region35: #{tpu_custom_call.1} parent=31 // pred_region
          %s184 = smul.u32 19, %s14
          %p185 = scmp.lt.s32.totalorder %s184, 37
          %s186 = scalar_select %p185, %s184, 37
          %s187 = smul.addr %s186, 8
          %s188 = scalar_lea.vmem %s0, %s187
          %s189 = smul.u32 19, %s14
        $region36: #{tpu_custom_call.1} parent=31 // pred_fallthru
          _
      $region32: #{tpu_custom_call.1} parent=5 // pred_fallthru
        _
      %p190 = scmp.le.s32.totalorder 1, %s14
      %p191 = scmp.lt.s32.totalorder %s14, 3
      %p192 = pnand %p190, %p191
      %p193 = pneg %p192
      // Predicated region
      $region37: #{tpu_custom_call.1} parent=5 // pred_check
        _
      $region38: #{tpu_custom_call.1} parent=5 // pred_check_branch
        %195 = sbr.rel (%p192) target = $region40
      $region39: #{tpu_custom_call.1} parent=5 // pred_region
        %s196 = ssub.s32 %s14, 1
        %s197 = smul.u32 19, %s19
        %p198 = scmp.lt.s32.totalorder %s197, 37
        %s199 = scalar_select %p198, %s197, 37
        %s200 = smul.addr %s199, 8
        %s201 = scalar_lea.vmem %s0, %s200
        %p202 = pneg %p40
        %p203 = pneg %p37
        %p204 = pneg %p61
        %p205 = pneg %p58
        %p206 = pneg %p82
        %p207 = pneg %p79
        %p208 = pneg %p103
        %p209 = pneg %p100
        %p210 = pneg %p124
        %p211 = pneg %p121
        %p212 = pneg %p150
        %p213 = pneg %p147
        %s214 = sand.u32 %s137, 1
        %s215 = scalar_lea.sflag [#allocation3], %s214
        %s216 = sand.u32 %s137, 1
        %s217 = smul.addr %s216, 152
        %s218 = scalar_lea.vmem [#allocation2], %s217
        %s219 = smul.u32 19, %s19
        %p220 = scmp.lt.s32.totalorder %s219, 37
        %s221 = scalar_select %p220, %s219, 37
        %s222 = smul.addr %s221, 8
        %s223 = scalar_lea.vmem %s0, %s222
        %s224 = smul.u32 19, %s19
        %s225 = smul.u32 19, %s19
        %v226 = vld [vmem:[%s223] sm:$0xff]
        %v227 = vld [vmem:[%s223 + $0x8] sm:$0xff]
        %v228 = vld [vmem:[%s223 + $0x10] sm:$0xff]
        %v229 = vld [vmem:[%s223 + $0x18] sm:$0xff]
        %v230 = vld [vmem:[%s223 + $0x20] sm:$0xff]
        %v231 = vld [vmem:[%s223 + $0x28] sm:$0xff]
        %v232 = vld [vmem:[%s223 + $0x30] sm:$0xff]
        %v233 = vld [vmem:[%s223 + $0x38] sm:$0xff]
        %v234 = vld [vmem:[%s223 + $0x40] sm:$0xff]
        %v235 = vld [vmem:[%s223 + $0x48] sm:$0xff]
        %v236 = vld [vmem:[%s223 + $0x50] sm:$0xff]
        %v237 = vld [vmem:[%s223 + $0x58] sm:$0xff]
        %v238 = vld [vmem:[%s223 + $0x60] sm:$0xff]
        %v239 = vld [vmem:[%s223 + $0x68] sm:$0xff]
        %v240 = vld [vmem:[%s223 + $0x70] sm:$0xff]
        %v241 = vld [vmem:[%s223 + $0x78] sm:$0xff]
        %v242 = vld [vmem:[%s223 + $0x80] sm:$0xff]
        %v243 = vld [vmem:[%s223 + $0x88] sm:$0xff]
        %v244 = vld [vmem:[%s223 + $0x90] sm:$0xff]
        %v245 = vld [vmem:[%s1] sm:$0x3f]
        %v246 = vld [vmem:[%s1 + $0x8] sm:$0x3f]
        %v247 = vld [vmem:[%s2] sm:$0x3]
        %v249 = vperm.slane %v247, 0
        %v250 = vperm.slane %v247, 1
        %vm253 = vcmask 48128
        %v255 = vsel %vm253, %v226, 0
        %v258 = vsel %vm253, %v227, 0
        %v261 = vsel %vm253, %v228, 0
        %v264 = vsel %vm253, %v229, 0
        %v267 = vsel %vm253, %v230, 0
        %v270 = vsel %vm253, %v231, 0
        %v273 = vsel %vm253, %v232, 0
        %v276 = vsel %vm253, %v233, 0
        %v279 = vsel %vm253, %v234, 0
        %v282 = vsel %vm253, %v235, 0
        %v285 = vsel %vm253, %v236, 0
        %v288 = vsel %vm253, %v237, 0
        %v291 = vsel %vm253, %v238, 0
        %v294 = vsel %vm253, %v239, 0
        %v297 = vsel %vm253, %v240, 0
        %v300 = vsel %vm253, %v241, 0
        %v303 = vsel %vm253, %v242, 0
        %v306 = vsel %vm253, %v243, 0
        %v309 = vsel %vm253, %v244, 0
        %vm311 = vcmask 1045504
        %v313 = vsel %vm311, %v245, 0
        %v316 = vsel %vm311, %v246, 0
        %318 = vmatpush.msra.mxu0 0.0
        %319 = vmatpush.msra.mxu0 0.0
        %320 = vmatpush.msra.mxu0 0.0
        %321 = vmatpush.msra.mxu0 0.0
        %322 = vmatpush.msra.mxu0 0.0
        %323 = vmatpush.msra.mxu0 0.0
        %324 = vmatpush.msra.mxu0 0.0
        %325 = vmatpush.msra.mxu0 0.0
        %326 = vmatpush.msra.mxu0 0.0
        %327 = vmatpush.msra.mxu0 0.0
        %328 = vmatpush.msra.mxu0 0.0
        %329 = vmatpush.msra.mxu0 0.0
        %330 = vmatpush.msra.mxu0 0.0
        %331 = vmatpush.msra.mxu0 0.0
        %332 = vmatpush.msra.mxu0 0.0
        %333 = vmatpush.msra.mxu0 %v313
        %334 = vmatmul.f32.gmra.mxu0 %v255
        %v335 = vpop.f32.mrf.mxu0
        %v336 = vadd.f32 %v249, %v335
        %337 = vmatmul.f32.gmra.mxu0 %v258
        %v338 = vpop.f32.mrf.mxu0
        %v339 = vadd.f32 %v249, %v338
        %340 = vmatmul.f32.gmra.mxu0 %v261
        %v341 = vpop.f32.mrf.mxu0
        %v342 = vadd.f32 %v249, %v341
        %343 = vmatmul.f32.gmra.mxu0 %v264
        %v344 = vpop.f32.mrf.mxu0
        %v345 = vadd.f32 %v249, %v344
        %346 = vmatmul.f32.gmra.mxu0 %v267
        %v347 = vpop.f32.mrf.mxu0
        %v348 = vadd.f32 %v249, %v347
        %349 = vmatmul.f32.gmra.mxu0 %v270
        %v350 = vpop.f32.mrf.mxu0
        %v351 = vadd.f32 %v249, %v350
        %352 = vmatmul.f32.gmra.mxu0 %v273
        %v353 = vpop.f32.mrf.mxu0
        %v354 = vadd.f32 %v249, %v353
        %355 = vmatmul.f32.gmra.mxu0 %v276
        %v356 = vpop.f32.mrf.mxu0
        %v357 = vadd.f32 %v249, %v356
        %358 = vmatmul.f32.gmra.mxu0 %v279
        %v359 = vpop.f32.mrf.mxu0
        %v360 = vadd.f32 %v249, %v359
        %361 = vmatmul.f32.gmra.mxu0 %v282
        %v362 = vpop.f32.mrf.mxu0
        %v363 = vadd.f32 %v249, %v362
        %364 = vmatmul.f32.gmra.mxu0 %v285
        %v365 = vpop.f32.mrf.mxu0
        %v366 = vadd.f32 %v249, %v365
        %367 = vmatmul.f32.gmra.mxu0 %v288
        %v368 = vpop.f32.mrf.mxu0
        %v369 = vadd.f32 %v249, %v368
        %370 = vmatmul.f32.gmra.mxu0 %v291
        %v371 = vpop.f32.mrf.mxu0
        %v372 = vadd.f32 %v249, %v371
        %373 = vmatmul.f32.gmra.mxu0 %v294
        %v374 = vpop.f32.mrf.mxu0
        %v375 = vadd.f32 %v249, %v374
        %376 = vmatmul.f32.gmra.mxu0 %v297
        %v377 = vpop.f32.mrf.mxu0
        %v378 = vadd.f32 %v249, %v377
        %379 = vmatmul.f32.gmra.mxu0 %v300
        %v380 = vpop.f32.mrf.mxu0
        %v381 = vadd.f32 %v249, %v380
        %382 = vmatmul.f32.gmra.mxu0 %v303
        %v383 = vpop.f32.mrf.mxu0
        %v384 = vadd.f32 %v249, %v383
        %385 = vmatmul.f32.gmra.mxu0 %v306
        %v386 = vpop.f32.mrf.mxu0
        %v387 = vadd.f32 %v249, %v386
        %388 = vmatmul.f32.gmra.mxu0 %v309
        %v389 = vpop.f32.mrf.mxu0
        %v390 = vadd.f32 %v249, %v389
        %391 = vdwg.mxu0
        %392 = vmatpush.msra.mxu0 0.0
        %393 = vmatpush.msra.mxu0 0.0
        %394 = vmatpush.msra.mxu0 0.0
        %395 = vmatpush.msra.mxu0 0.0
        %396 = vmatpush.msra.mxu0 0.0
        %397 = vmatpush.msra.mxu0 0.0
        %398 = vmatpush.msra.mxu0 0.0
        %399 = vmatpush.msra.mxu0 0.0
        %400 = vmatpush.msra.mxu0 0.0
        %401 = vmatpush.msra.mxu0 0.0
        %402 = vmatpush.msra.mxu0 0.0
        %403 = vmatpush.msra.mxu0 0.0
        %404 = vmatpush.msra.mxu0 0.0
        %405 = vmatpush.msra.mxu0 0.0
        %406 = vmatpush.msra.mxu0 0.0
        %407 = vmatpush.msra.mxu0 %v316
        %408 = vmatmul.f32.gmra.mxu0 %v255
        %v409 = vpop.f32.mrf.mxu0
        %v410 = vadd.f32 %v250, %v409
        %411 = vmatmul.f32.gmra.mxu0 %v258
        %v412 = vpop.f32.mrf.mxu0
        %v413 = vadd.f32 %v250, %v412
        %414 = vmatmul.f32.gmra.mxu0 %v261
        %v415 = vpop.f32.mrf.mxu0
        %v416 = vadd.f32 %v250, %v415
        %417 = vmatmul.f32.gmra.mxu0 %v264
        %v418 = vpop.f32.mrf.mxu0
        %v419 = vadd.f32 %v250, %v418
        %420 = vmatmul.f32.gmra.mxu0 %v267
        %v421 = vpop.f32.mrf.mxu0
        %v422 = vadd.f32 %v250, %v421
        %423 = vmatmul.f32.gmra.mxu0 %v270
        %v424 = vpop.f32.mrf.mxu0
        %v425 = vadd.f32 %v250, %v424
        %426 = vmatmul.f32.gmra.mxu0 %v273
        %v427 = vpop.f32.mrf.mxu0
        %v428 = vadd.f32 %v250, %v427
        %429 = vmatmul.f32.gmra.mxu0 %v276
        %v430 = vpop.f32.mrf.mxu0
        %v431 = vadd.f32 %v250, %v430
        %432 = vmatmul.f32.gmra.mxu0 %v279
        %v433 = vpop.f32.mrf.mxu0
        %v434 = vadd.f32 %v250, %v433
        %435 = vmatmul.f32.gmra.mxu0 %v282
        %v436 = vpop.f32.mrf.mxu0
        %v437 = vadd.f32 %v250, %v436
        %438 = vmatmul.f32.gmra.mxu0 %v285
        %v439 = vpop.f32.mrf.mxu0
        %v440 = vadd.f32 %v250, %v439
        %441 = vmatmul.f32.gmra.mxu0 %v288
        %v442 = vpop.f32.mrf.mxu0
        %v443 = vadd.f32 %v250, %v442
        %444 = vmatmul.f32.gmra.mxu0 %v291
        %v445 = vpop.f32.mrf.mxu0
        %v446 = vadd.f32 %v250, %v445
        %447 = vmatmul.f32.gmra.mxu0 %v294
        %v448 = vpop.f32.mrf.mxu0
        %v449 = vadd.f32 %v250, %v448
        %450 = vmatmul.f32.gmra.mxu0 %v297
        %v451 = vpop.f32.mrf.mxu0
        %v452 = vadd.f32 %v250, %v451
        %453 = vmatmul.f32.gmra.mxu0 %v300
        %v454 = vpop.f32.mrf.mxu0
        %v455 = vadd.f32 %v250, %v454
        %456 = vmatmul.f32.gmra.mxu0 %v303
        %v457 = vpop.f32.mrf.mxu0
        %v458 = vadd.f32 %v250, %v457
        %459 = vmatmul.f32.gmra.mxu0 %v306
        %v460 = vpop.f32.mrf.mxu0
        %v461 = vadd.f32 %v250, %v460
        %462 = vmatmul.f32.gmra.mxu0 %v309
        %v463 = vpop.f32.mrf.mxu0
        %v464 = vadd.f32 %v250, %v463
        %465 = vdwg.mxu0
        %v466 = vmax.f32 %v336, 0.0
        %v467 = vmax.f32 %v410, 0.0
        %v468 = vmax.f32 %v339, 0.0
        %v469 = vmax.f32 %v413, 0.0
        %v470 = vmax.f32 %v342, 0.0
        %v471 = vmax.f32 %v416, 0.0
        %v472 = vmax.f32 %v345, 0.0
        %v473 = vmax.f32 %v419, 0.0
        %v474 = vmax.f32 %v348, 0.0
        %v475 = vmax.f32 %v422, 0.0
        %v476 = vmax.f32 %v351, 0.0
        %v477 = vmax.f32 %v425, 0.0
        %v478 = vmax.f32 %v354, 0.0
        %v479 = vmax.f32 %v428, 0.0
        %v480 = vmax.f32 %v357, 0.0
        %v481 = vmax.f32 %v431, 0.0
        %v482 = vmax.f32 %v360, 0.0
        %v483 = vmax.f32 %v434, 0.0
        %v484 = vmax.f32 %v363, 0.0
        %v485 = vmax.f32 %v437, 0.0
        %v486 = vmax.f32 %v366, 0.0
        %v487 = vmax.f32 %v440, 0.0
        %v488 = vmax.f32 %v369, 0.0
        %v489 = vmax.f32 %v443, 0.0
        %v490 = vmax.f32 %v372, 0.0
        %v491 = vmax.f32 %v446, 0.0
        %v492 = vmax.f32 %v375, 0.0
        %v493 = vmax.f32 %v449, 0.0
        %v494 = vmax.f32 %v378, 0.0
        %v495 = vmax.f32 %v452, 0.0
        %v496 = vmax.f32 %v381, 0.0
        %v497 = vmax.f32 %v455, 0.0
        %v498 = vmax.f32 %v384, 0.0
        %v499 = vmax.f32 %v458, 0.0
        %v500 = vmax.f32 %v387, 0.0
        %v501 = vmax.f32 %v461, 0.0
        %v502 = vmax.f32 %v390, 0.0
        %v503 = vmax.f32 %v464, 0.0
        %v504 = vld [vmem:[%s3] sm:$0xff]
        %v505 = vld [vmem:[%s3 + $0x8] sm:$0xff]
        %v506 = vld [vmem:[%s3 + $0x10] sm:$0xff]
        %v507 = vld [vmem:[%s3 + $0x18] sm:$0xff]
        %v508 = vld [vmem:[%s3 + $0x20] sm:$0xff]
        %v509 = vld [vmem:[%s3 + $0x28] sm:$0xff]
        %v510 = vld [vmem:[%s3 + $0x30] sm:$0xff]
        %v511 = vld [vmem:[%s3 + $0x38] sm:$0xff]
        %v512 = vld [vmem:[%s3 + $0x40] sm:$0xff]
        %v513 = vld [vmem:[%s3 + $0x48] sm:$0xff]
        %v514 = vld [vmem:[%s3 + $0x50] sm:$0xff]
        %v515 = vld [vmem:[%s3 + $0x58] sm:$0xff]
        %v516 = vld [vmem:[%s3 + $0x60] sm:$0xff]
        %v517 = vld [vmem:[%s3 + $0x68] sm:$0xff]
        %v518 = vld [vmem:[%s3 + $0x70] sm:$0xff]
        %v519 = vld [vmem:[%s3 + $0x78] sm:$0xff]
        %v520 = vld [vmem:[%s3 + $0x80] sm:$0xff]
        %v521 = vld [vmem:[%s3 + $0x88] sm:$0xff]
        %v522 = vld [vmem:[%s3 + $0x90] sm:$0xff]
        %v523 = vld [vmem:[%s3 + $0x98] sm:$0xff]
        %v524 = vld [vmem:[%s3 + $0xa0] sm:$0xff]
        %v525 = vld [vmem:[%s3 + $0xa8] sm:$0xff]
        %v526 = vld [vmem:[%s3 + $0xb0] sm:$0xff]
        %v527 = vld [vmem:[%s3 + $0xb8] sm:$0xff]
        %v528 = vld [vmem:[%s3 + $0xc0] sm:$0xff]
        %v529 = vld [vmem:[%s3 + $0xc8] sm:$0xff]
        %v530 = vld [vmem:[%s3 + $0xd0] sm:$0xff]
        %v531 = vld [vmem:[%s3 + $0xd8] sm:$0xff]
        %v532 = vld [vmem:[%s3 + $0xe0] sm:$0xff]
        %v533 = vld [vmem:[%s3 + $0xe8] sm:$0xff]
        %v534 = vld [vmem:[%s3 + $0xf0] sm:$0xff]
        %v535 = vld [vmem:[%s3 + $0xf8] sm:$0xff]
        %v536 = vld [vmem:[%s4] sm:$0x1]
        %v538 = vperm.slane %v536, 0
        %540 = vmatpush.msra.mxu0 %v519
        %541 = vmatpush.msra.mxu0 %v518
        %542 = vmatpush.msra.mxu0 %v517
        %543 = vmatpush.msra.mxu0 %v516
        %544 = vmatpush.msra.mxu0 %v515
        %545 = vmatpush.msra.mxu0 %v514
        %546 = vmatpush.msra.mxu0 %v513
        %547 = vmatpush.msra.mxu0 %v512
        %548 = vmatpush.msra.mxu0 %v511
        %549 = vmatpush.msra.mxu0 %v510
        %550 = vmatpush.msra.mxu0 %v509
        %551 = vmatpush.msra.mxu0 %v508
        %552 = vmatpush.msra.mxu0 %v507
        %553 = vmatpush.msra.mxu0 %v506
        %554 = vmatpush.msra.mxu0 %v505
        %555 = vmatpush.msra.mxu0 %v504
        %556 = vmatmul.f32.gmra.mxu0 %v466
        %v557 = vpop.f32.mrf.mxu0
        %v558 = vadd.f32 %v538, %v557
        %559 = vmatmul.f32.gmra.mxu0 %v468
        %v560 = vpop.f32.mrf.mxu0
        %v561 = vadd.f32 %v538, %v560
        %562 = vmatmul.f32.gmra.mxu0 %v470
        %v563 = vpop.f32.mrf.mxu0
        %v564 = vadd.f32 %v538, %v563
        %565 = vmatmul.f32.gmra.mxu0 %v472
        %v566 = vpop.f32.mrf.mxu0
        %v567 = vadd.f32 %v538, %v566
        %568 = vmatmul.f32.gmra.mxu0 %v474
        %v569 = vpop.f32.mrf.mxu0
        %v570 = vadd.f32 %v538, %v569
        %571 = vmatmul.f32.gmra.mxu0 %v476
        %v572 = vpop.f32.mrf.mxu0
        %v573 = vadd.f32 %v538, %v572
        %574 = vmatmul.f32.gmra.mxu0 %v478
        %v575 = vpop.f32.mrf.mxu0
        %v576 = vadd.f32 %v538, %v575
        %577 = vmatmul.f32.gmra.mxu0 %v480
        %v578 = vpop.f32.mrf.mxu0
        %v579 = vadd.f32 %v538, %v578
        %580 = vmatmul.f32.gmra.mxu0 %v482
        %v581 = vpop.f32.mrf.mxu0
        %v582 = vadd.f32 %v538, %v581
        %583 = vmatmul.f32.gmra.mxu0 %v484
        %v584 = vpop.f32.mrf.mxu0
        %v585 = vadd.f32 %v538, %v584
        %586 = vmatmul.f32.gmra.mxu0 %v486
        %v587 = vpop.f32.mrf.mxu0
        %v588 = vadd.f32 %v538, %v587
        %589 = vmatmul.f32.gmra.mxu0 %v488
        %v590 = vpop.f32.mrf.mxu0
        %v591 = vadd.f32 %v538, %v590
        %592 = vmatmul.f32.gmra.mxu0 %v490
        %v593 = vpop.f32.mrf.mxu0
        %v594 = vadd.f32 %v538, %v593
        %595 = vmatmul.f32.gmra.mxu0 %v492
        %v596 = vpop.f32.mrf.mxu0
        %v597 = vadd.f32 %v538, %v596
        %598 = vmatmul.f32.gmra.mxu0 %v494
        %v599 = vpop.f32.mrf.mxu0
        %v600 = vadd.f32 %v538, %v599
        %601 = vmatmul.f32.gmra.mxu0 %v496
        %v602 = vpop.f32.mrf.mxu0
        %v603 = vadd.f32 %v538, %v602
        %604 = vmatmul.f32.gmra.mxu0 %v498
        %v605 = vpop.f32.mrf.mxu0
        %v606 = vadd.f32 %v538, %v605
        %607 = vmatmul.f32.gmra.mxu0 %v500
        %v608 = vpop.f32.mrf.mxu0
        %v609 = vadd.f32 %v538, %v608
        %610 = vmatmul.f32.gmra.mxu0 %v502
        %v611 = vpop.f32.mrf.mxu0
        %v612 = vadd.f32 %v538, %v611
        %613 = vdwg.mxu0
        %614 = vmatpush.msra.mxu0 %v535
        %615 = vmatpush.msra.mxu0 %v534
        %616 = vmatpush.msra.mxu0 %v533
        %617 = vmatpush.msra.mxu0 %v532
        %618 = vmatpush.msra.mxu0 %v531
        %619 = vmatpush.msra.mxu0 %v530
        %620 = vmatpush.msra.mxu0 %v529
        %621 = vmatpush.msra.mxu0 %v528
        %622 = vmatpush.msra.mxu0 %v527
        %623 = vmatpush.msra.mxu0 %v526
        %624 = vmatpush.msra.mxu0 %v525
        %625 = vmatpush.msra.mxu0 %v524
        %626 = vmatpush.msra.mxu0 %v523
        %627 = vmatpush.msra.mxu0 %v522
        %628 = vmatpush.msra.mxu0 %v521
        %629 = vmatpush.msra.mxu0 %v520
        %630 = vmatmul.f32.gmra.mxu0 %v467
        %v631 = vpop.f32.mrf.mxu0
        %v632 = vadd.f32 %v558, %v631
        %633 = vmatmul.f32.gmra.mxu0 %v469
        %v634 = vpop.f32.mrf.mxu0
        %v635 = vadd.f32 %v561, %v634
        %636 = vmatmul.f32.gmra.mxu0 %v471
        %v637 = vpop.f32.mrf.mxu0
        %v638 = vadd.f32 %v564, %v637
        %639 = vmatmul.f32.gmra.mxu0 %v473
        %v640 = vpop.f32.mrf.mxu0
        %v641 = vadd.f32 %v567, %v640
        %642 = vmatmul.f32.gmra.mxu0 %v475
        %v643 = vpop.f32.mrf.mxu0
        %v644 = vadd.f32 %v570, %v643
        %645 = vmatmul.f32.gmra.mxu0 %v477
        %v646 = vpop.f32.mrf.mxu0
        %v647 = vadd.f32 %v573, %v646
        %648 = vmatmul.f32.gmra.mxu0 %v479
        %v649 = vpop.f32.mrf.mxu0
        %v650 = vadd.f32 %v576, %v649
        %651 = vmatmul.f32.gmra.mxu0 %v481
        %v652 = vpop.f32.mrf.mxu0
        %v653 = vadd.f32 %v579, %v652
        %654 = vmatmul.f32.gmra.mxu0 %v483
        %v655 = vpop.f32.mrf.mxu0
        %v656 = vadd.f32 %v582, %v655
        %657 = vmatmul.f32.gmra.mxu0 %v485
        %v658 = vpop.f32.mrf.mxu0
        %v659 = vadd.f32 %v585, %v658
        %660 = vmatmul.f32.gmra.mxu0 %v487
        %v661 = vpop.f32.mrf.mxu0
        %v662 = vadd.f32 %v588, %v661
        %663 = vmatmul.f32.gmra.mxu0 %v489
        %v664 = vpop.f32.mrf.mxu0
        %v665 = vadd.f32 %v591, %v664
        %666 = vmatmul.f32.gmra.mxu0 %v491
        %v667 = vpop.f32.mrf.mxu0
        %v668 = vadd.f32 %v594, %v667
        %669 = vmatmul.f32.gmra.mxu0 %v493
        %v670 = vpop.f32.mrf.mxu0
        %v671 = vadd.f32 %v597, %v670
        %672 = vmatmul.f32.gmra.mxu0 %v495
        %v673 = vpop.f32.mrf.mxu0
        %v674 = vadd.f32 %v600, %v673
        %675 = vmatmul.f32.gmra.mxu0 %v497
        %v676 = vpop.f32.mrf.mxu0
        %v677 = vadd.f32 %v603, %v676
        %678 = vmatmul.f32.gmra.mxu0 %v499
        %v679 = vpop.f32.mrf.mxu0
        %v680 = vadd.f32 %v606, %v679
        %681 = vmatmul.f32.gmra.mxu0 %v501
        %v682 = vpop.f32.mrf.mxu0
        %v683 = vadd.f32 %v609, %v682
        %684 = vmatmul.f32.gmra.mxu0 %v503
        %v685 = vpop.f32.mrf.mxu0
        %v686 = vadd.f32 %v612, %v685
        %687 = vdwg.mxu0
        %v688 = vlaneseq
        %v689 = vand.u32 %v688, 127
        %vm690 = vcmp.lt.s32.totalorder %v689, 3
        %v691 = vsel %vm690, %v632, -1e+30
        %v692 = vsel %vm690, %v635, -1e+30
        %v693 = vsel %vm690, %v638, -1e+30
        %v694 = vsel %vm690, %v641, -1e+30
        %v695 = vsel %vm690, %v644, -1e+30
        %v696 = vsel %vm690, %v647, -1e+30
        %v697 = vsel %vm690, %v650, -1e+30
        %v698 = vsel %vm690, %v653, -1e+30
        %v699 = vsel %vm690, %v656, -1e+30
        %v700 = vsel %vm690, %v659, -1e+30
        %v701 = vsel %vm690, %v662, -1e+30
        %v702 = vsel %vm690, %v665, -1e+30
        %v703 = vsel %vm690, %v668, -1e+30
        %v704 = vsel %vm690, %v671, -1e+30
        %v705 = vsel %vm690, %v674, -1e+30
        %v706 = vsel %vm690, %v677, -1e+30
        %v707 = vsel %vm690, %v680, -1e+30
        %v708 = vsel %vm690, %v683, -1e+30
        %v709 = vsel %vm690, %v686, -1e+30
        %710 = vmax.xlane.f32.xlu0 %v691
        %v711 = vpop.xlane.xlu0 %710
        %712 = vmax.xlane.f32.xlu0 %v692
        %v713 = vpop.xlane.xlu0 %712
        %714 = vmax.xlane.f32.xlu0 %v693
        %v715 = vpop.xlane.xlu0 %714
        %716 = vmax.xlane.f32.xlu0 %v694
        %v717 = vpop.xlane.xlu0 %716
        %718 = vmax.xlane.f32.xlu0 %v695
        %v719 = vpop.xlane.xlu0 %718
        %720 = vmax.xlane.f32.xlu0 %v696
        %v721 = vpop.xlane.xlu0 %720
        %722 = vmax.xlane.f32.xlu0 %v697
        %v723 = vpop.xlane.xlu0 %722
        %724 = vmax.xlane.f32.xlu0 %v698
        %v725 = vpop.xlane.xlu0 %724
        %726 = vmax.xlane.f32.xlu0 %v699
        %v727 = vpop.xlane.xlu0 %726
        %728 = vmax.xlane.f32.xlu0 %v700
        %v729 = vpop.xlane.xlu0 %728
        %730 = vmax.xlane.f32.xlu0 %v701
        %v731 = vpop.xlane.xlu0 %730
        %732 = vmax.xlane.f32.xlu0 %v702
        %v733 = vpop.xlane.xlu0 %732
        %734 = vmax.xlane.f32.xlu0 %v703
        %v735 = vpop.xlane.xlu0 %734
        %736 = vmax.xlane.f32.xlu0 %v704
        %v737 = vpop.xlane.xlu0 %736
        %738 = vmax.xlane.f32.xlu0 %v705
        %v739 = vpop.xlane.xlu0 %738
        %740 = vmax.xlane.f32.xlu0 %v706
        %v741 = vpop.xlane.xlu0 %740
        %742 = vmax.xlane.f32.xlu0 %v707
        %v743 = vpop.xlane.xlu0 %742
        %744 = vmax.xlane.f32.xlu0 %v708
        %v745 = vpop.xlane.xlu0 %744
        %746 = vmax.xlane.f32.xlu0 %v709
        %v747 = vpop.xlane.xlu0 %746
        %v748 = vsub.f32 %v691, %v711
        %v749 = vsub.f32 %v692, %v713
        %v750 = vsub.f32 %v693, %v715
        %v751 = vsub.f32 %v694, %v717
        %v752 = vsub.f32 %v695, %v719
        %v753 = vsub.f32 %v696, %v721
        %v754 = vsub.f32 %v697, %v723
        %v755 = vsub.f32 %v698, %v725
        %v756 = vsub.f32 %v699, %v727
        %v757 = vsub.f32 %v700, %v729
        %v758 = vsub.f32 %v701, %v731
        %v759 = vsub.f32 %v702, %v733
        %v760 = vsub.f32 %v703, %v735
        %v761 = vsub.f32 %v704, %v737
        %v762 = vsub.f32 %v705, %v739
        %v763 = vsub.f32 %v706, %v741
        %v764 = vsub.f32 %v707, %v743
        %v765 = vsub.f32 %v708, %v745
        %v766 = vsub.f32 %v709, %v747
        %v767 = vmul.f32 %v748, 1.442695
        %v768 = vpow.pop %v767
        %v769 = vmul.f32 %v749, 1.442695
        %v770 = vpow.pop %v769
        %v771 = vmul.f32 %v750, 1.442695
        %v772 = vpow.pop %v771
        %v773 = vmul.f32 %v751, 1.442695
        %v774 = vpow.pop %v773
        %v775 = vmul.f32 %v752, 1.442695
        %v776 = vpow.pop %v775
        %v777 = vmul.f32 %v753, 1.442695
        %v778 = vpow.pop %v777
        %v779 = vmul.f32 %v754, 1.442695
        %v780 = vpow.pop %v779
        %v781 = vmul.f32 %v755, 1.442695
        %v782 = vpow.pop %v781
        %v783 = vmul.f32 %v756, 1.442695
        %v784 = vpow.pop %v783
        %v785 = vmul.f32 %v757, 1.442695
        %v786 = vpow.pop %v785
        %v787 = vmul.f32 %v758, 1.442695
        %v788 = vpow.pop %v787
        %v789 = vmul.f32 %v759, 1.442695
        %v790 = vpow.pop %v789
        %v791 = vmul.f32 %v760, 1.442695
        %v792 = vpow.pop %v791
        %v793 = vmul.f32 %v761, 1.442695
        %v794 = vpow.pop %v793
        %v795 = vmul.f32 %v762, 1.442695
        %v796 = vpow.pop %v795
        %v797 = vmul.f32 %v763, 1.442695
        %v798 = vpow.pop %v797
        %v799 = vmul.f32 %v764, 1.442695
        %v800 = vpow.pop %v799
        %v801 = vmul.f32 %v765, 1.442695
        %v802 = vpow.pop %v801
        %v803 = vmul.f32 %v766, 1.442695
        %v804 = vpow.pop %v803
        %805 = vadd.xlane.f32.xlu0 %v768
        %v806 = vpop.xlane.xlu0 %805
        %807 = vadd.xlane.f32.xlu0 %v770
        %v808 = vpop.xlane.xlu0 %807
        %809 = vadd.xlane.f32.xlu0 %v772
        %v810 = vpop.xlane.xlu0 %809
        %811 = vadd.xlane.f32.xlu0 %v774
        %v812 = vpop.xlane.xlu0 %811
        %813 = vadd.xlane.f32.xlu0 %v776
        %v814 = vpop.xlane.xlu0 %813
        %815 = vadd.xlane.f32.xlu0 %v778
        %v816 = vpop.xlane.xlu0 %815
        %817 = vadd.xlane.f32.xlu0 %v780
        %v818 = vpop.xlane.xlu0 %817
        %819 = vadd.xlane.f32.xlu0 %v782
        %v820 = vpop.xlane.xlu0 %819
        %821 = vadd.xlane.f32.xlu0 %v784
        %v822 = vpop.xlane.xlu0 %821
        %823 = vadd.xlane.f32.xlu0 %v786
        %v824 = vpop.xlane.xlu0 %823
        %825 = vadd.xlane.f32.xlu0 %v788
        %v826 = vpop.xlane.xlu0 %825
        %827 = vadd.xlane.f32.xlu0 %v790
        %v828 = vpop.xlane.xlu0 %827
        %829 = vadd.xlane.f32.xlu0 %v792
        %v830 = vpop.xlane.xlu0 %829
        %831 = vadd.xlane.f32.xlu0 %v794
        %v832 = vpop.xlane.xlu0 %831
        %833 = vadd.xlane.f32.xlu0 %v796
        %v834 = vpop.xlane.xlu0 %833
        %835 = vadd.xlane.f32.xlu0 %v798
        %v836 = vpop.xlane.xlu0 %835
        %837 = vadd.xlane.f32.xlu0 %v800
        %v838 = vpop.xlane.xlu0 %837
        %839 = vadd.xlane.f32.xlu0 %v802
        %v840 = vpop.xlane.xlu0 %839
        %841 = vadd.xlane.f32.xlu0 %v804
        %v842 = vpop.xlane.xlu0 %841
        %v843 = vrcp.pop %v806
        %v844 = vmul.f32 %v806, %v843
        %v845 = vsub.f32 1.0, %v844
        %v846 = vmul.f32 %v843, %v845
        %v847 = vadd.f32 %v843, %v846
        %vm848 = vweird.f32 %v806
        %vm849 = vweird.f32 %v843
        %vm850 = vmor %vm848, %vm849
        %v851 = vsel %vm850, %v843, %v847
        %v852 = vand.u32 2147483647, %v806
        %vm853 = vcmp.eq.f32.partialorder %v852, 8.507059e+37
        %v854 = vand.u32 %v806, 2147483648
        %v855 = vor.u32 1.1754944e-38, %v854
        %v856 = vsel %vm853, %v855, %v851
        %v857 = vmul.f32 %v768, %v856
        %v858 = vrcp.pop %v808
        %v859 = vmul.f32 %v808, %v858
        %v860 = vsub.f32 1.0, %v859
        %v861 = vmul.f32 %v858, %v860
        %v862 = vadd.f32 %v858, %v861
        %vm863 = vweird.f32 %v808
        %vm864 = vweird.f32 %v858
        %vm865 = vmor %vm863, %vm864
        %v866 = vsel %vm865, %v858, %v862
        %v867 = vand.u32 2147483647, %v808
        %vm868 = vcmp.eq.f32.partialorder %v867, 8.507059e+37
        %v869 = vand.u32 %v808, 2147483648
        %v870 = vor.u32 1.1754944e-38, %v869
        %v871 = vsel %vm868, %v870, %v866
        %v872 = vmul.f32 %v770, %v871
        %v873 = vrcp.pop %v810
        %v874 = vmul.f32 %v810, %v873
        %v875 = vsub.f32 1.0, %v874
        %v876 = vmul.f32 %v873, %v875
        %v877 = vadd.f32 %v873, %v876
        %vm878 = vweird.f32 %v810
        %vm879 = vweird.f32 %v873
        %vm880 = vmor %vm878, %vm879
        %v881 = vsel %vm880, %v873, %v877
        %v882 = vand.u32 2147483647, %v810
        %vm883 = vcmp.eq.f32.partialorder %v882, 8.507059e+37
        %v884 = vand.u32 %v810, 2147483648
        %v885 = vor.u32 1.1754944e-38, %v884
        %v886 = vsel %vm883, %v885, %v881
        %v887 = vmul.f32 %v772, %v886
        %v888 = vrcp.pop %v812
        %v889 = vmul.f32 %v812, %v888
        %v890 = vsub.f32 1.0, %v889
        %v891 = vmul.f32 %v888, %v890
        %v892 = vadd.f32 %v888, %v891
        %vm893 = vweird.f32 %v812
        %vm894 = vweird.f32 %v888
        %vm895 = vmor %vm893, %vm894
        %v896 = vsel %vm895, %v888, %v892
        %v897 = vand.u32 2147483647, %v812
        %vm898 = vcmp.eq.f32.partialorder %v897, 8.507059e+37
        %v899 = vand.u32 %v812, 2147483648
        %v900 = vor.u32 1.1754944e-38, %v899
        %v901 = vsel %vm898, %v900, %v896
        %v902 = vmul.f32 %v774, %v901
        %v903 = vrcp.pop %v814
        %v904 = vmul.f32 %v814, %v903
        %v905 = vsub.f32 1.0, %v904
        %v906 = vmul.f32 %v903, %v905
        %v907 = vadd.f32 %v903, %v906
        %vm908 = vweird.f32 %v814
        %vm909 = vweird.f32 %v903
        %vm910 = vmor %vm908, %vm909
        %v911 = vsel %vm910, %v903, %v907
        %v912 = vand.u32 2147483647, %v814
        %vm913 = vcmp.eq.f32.partialorder %v912, 8.507059e+37
        %v914 = vand.u32 %v814, 2147483648
        %v915 = vor.u32 1.1754944e-38, %v914
        %v916 = vsel %vm913, %v915, %v911
        %v917 = vmul.f32 %v776, %v916
        %v918 = vrcp.pop %v816
        %v919 = vmul.f32 %v816, %v918
        %v920 = vsub.f32 1.0, %v919
        %v921 = vmul.f32 %v918, %v920
        %v922 = vadd.f32 %v918, %v921
        %vm923 = vweird.f32 %v816
        %vm924 = vweird.f32 %v918
        %vm925 = vmor %vm923, %vm924
        %v926 = vsel %vm925, %v918, %v922
        %v927 = vand.u32 2147483647, %v816
        %vm928 = vcmp.eq.f32.partialorder %v927, 8.507059e+37
        %v929 = vand.u32 %v816, 2147483648
        %v930 = vor.u32 1.1754944e-38, %v929
        %v931 = vsel %vm928, %v930, %v926
        %v932 = vmul.f32 %v778, %v931
        %v933 = vrcp.pop %v818
        %v934 = vmul.f32 %v818, %v933
        %v935 = vsub.f32 1.0, %v934
        %v936 = vmul.f32 %v933, %v935
        %v937 = vadd.f32 %v933, %v936
        %vm938 = vweird.f32 %v818
        %vm939 = vweird.f32 %v933
        %vm940 = vmor %vm938, %vm939
        %v941 = vsel %vm940, %v933, %v937
        %v942 = vand.u32 2147483647, %v818
        %vm943 = vcmp.eq.f32.partialorder %v942, 8.507059e+37
        %v944 = vand.u32 %v818, 2147483648
        %v945 = vor.u32 1.1754944e-38, %v944
        %v946 = vsel %vm943, %v945, %v941
        %v947 = vmul.f32 %v780, %v946
        %v948 = vrcp.pop %v820
        %v949 = vmul.f32 %v820, %v948
        %v950 = vsub.f32 1.0, %v949
        %v951 = vmul.f32 %v948, %v950
        %v952 = vadd.f32 %v948, %v951
        %vm953 = vweird.f32 %v820
        %vm954 = vweird.f32 %v948
        %vm955 = vmor %vm953, %vm954
        %v956 = vsel %vm955, %v948, %v952
        %v957 = vand.u32 2147483647, %v820
        %vm958 = vcmp.eq.f32.partialorder %v957, 8.507059e+37
        %v959 = vand.u32 %v820, 2147483648
        %v960 = vor.u32 1.1754944e-38, %v959
        %v961 = vsel %vm958, %v960, %v956
        %v962 = vmul.f32 %v782, %v961
        %v963 = vrcp.pop %v822
        %v964 = vmul.f32 %v822, %v963
        %v965 = vsub.f32 1.0, %v964
        %v966 = vmul.f32 %v963, %v965
        %v967 = vadd.f32 %v963, %v966
        %vm968 = vweird.f32 %v822
        %vm969 = vweird.f32 %v963
        %vm970 = vmor %vm968, %vm969
        %v971 = vsel %vm970, %v963, %v967
        %v972 = vand.u32 2147483647, %v822
        %vm973 = vcmp.eq.f32.partialorder %v972, 8.507059e+37
        %v974 = vand.u32 %v822, 2147483648
        %v975 = vor.u32 1.1754944e-38, %v974
        %v976 = vsel %vm973, %v975, %v971
        %v977 = vmul.f32 %v784, %v976
        %v978 = vrcp.pop %v824
        %v979 = vmul.f32 %v824, %v978
        %v980 = vsub.f32 1.0, %v979
        %v981 = vmul.f32 %v978, %v980
        %v982 = vadd.f32 %v978, %v981
        %vm983 = vweird.f32 %v824
        %vm984 = vweird.f32 %v978
        %vm985 = vmor %vm983, %vm984
        %v986 = vsel %vm985, %v978, %v982
        %v987 = vand.u32 2147483647, %v824
        %vm988 = vcmp.eq.f32.partialorder %v987, 8.507059e+37
        %v989 = vand.u32 %v824, 2147483648
        %v990 = vor.u32 1.1754944e-38, %v989
        %v991 = vsel %vm988, %v990, %v986
        %v992 = vmul.f32 %v786, %v991
        %v993 = vrcp.pop %v826
        %v994 = vmul.f32 %v826, %v993
        %v995 = vsub.f32 1.0, %v994
        %v996 = vmul.f32 %v993, %v995
        %v997 = vadd.f32 %v993, %v996
        %vm998 = vweird.f32 %v826
        %vm999 = vweird.f32 %v993
        %vm1000 = vmor %vm998, %vm999
        %v1001 = vsel %vm1000, %v993, %v997
        %v1002 = vand.u32 2147483647, %v826
        %vm1003 = vcmp.eq.f32.partialorder %v1002, 8.507059e+37
        %v1004 = vand.u32 %v826, 2147483648
        %v1005 = vor.u32 1.1754944e-38, %v1004
        %v1006 = vsel %vm1003, %v1005, %v1001
        %v1007 = vmul.f32 %v788, %v1006
        %v1008 = vrcp.pop %v828
        %v1009 = vmul.f32 %v828, %v1008
        %v1010 = vsub.f32 1.0, %v1009
        %v1011 = vmul.f32 %v1008, %v1010
        %v1012 = vadd.f32 %v1008, %v1011
        %vm1013 = vweird.f32 %v828
        %vm1014 = vweird.f32 %v1008
        %vm1015 = vmor %vm1013, %vm1014
        %v1016 = vsel %vm1015, %v1008, %v1012
        %v1017 = vand.u32 2147483647, %v828
        %vm1018 = vcmp.eq.f32.partialorder %v1017, 8.507059e+37
        %v1019 = vand.u32 %v828, 2147483648
        %v1020 = vor.u32 1.1754944e-38, %v1019
        %v1021 = vsel %vm1018, %v1020, %v1016
        %v1022 = vmul.f32 %v790, %v1021
        %v1023 = vrcp.pop %v830
        %v1024 = vmul.f32 %v830, %v1023
        %v1025 = vsub.f32 1.0, %v1024
        %v1026 = vmul.f32 %v1023, %v1025
        %v1027 = vadd.f32 %v1023, %v1026
        %vm1028 = vweird.f32 %v830
        %vm1029 = vweird.f32 %v1023
        %vm1030 = vmor %vm1028, %vm1029
        %v1031 = vsel %vm1030, %v1023, %v1027
        %v1032 = vand.u32 2147483647, %v830
        %vm1033 = vcmp.eq.f32.partialorder %v1032, 8.507059e+37
        %v1034 = vand.u32 %v830, 2147483648
        %v1035 = vor.u32 1.1754944e-38, %v1034
        %v1036 = vsel %vm1033, %v1035, %v1031
        %v1037 = vmul.f32 %v792, %v1036
        %v1038 = vrcp.pop %v832
        %v1039 = vmul.f32 %v832, %v1038
        %v1040 = vsub.f32 1.0, %v1039
        %v1041 = vmul.f32 %v1038, %v1040
        %v1042 = vadd.f32 %v1038, %v1041
        %vm1043 = vweird.f32 %v832
        %vm1044 = vweird.f32 %v1038
        %vm1045 = vmor %vm1043, %vm1044
        %v1046 = vsel %vm1045, %v1038, %v1042
        %v1047 = vand.u32 2147483647, %v832
        %vm1048 = vcmp.eq.f32.partialorder %v1047, 8.507059e+37
        %v1049 = vand.u32 %v832, 2147483648
        %v1050 = vor.u32 1.1754944e-38, %v1049
        %v1051 = vsel %vm1048, %v1050, %v1046
        %v1052 = vmul.f32 %v794, %v1051
        %v1053 = vrcp.pop %v834
        %v1054 = vmul.f32 %v834, %v1053
        %v1055 = vsub.f32 1.0, %v1054
        %v1056 = vmul.f32 %v1053, %v1055
        %v1057 = vadd.f32 %v1053, %v1056
        %vm1058 = vweird.f32 %v834
        %vm1059 = vweird.f32 %v1053
        %vm1060 = vmor %vm1058, %vm1059
        %v1061 = vsel %vm1060, %v1053, %v1057
        %v1062 = vand.u32 2147483647, %v834
        %vm1063 = vcmp.eq.f32.partialorder %v1062, 8.507059e+37
        %v1064 = vand.u32 %v834, 2147483648
        %v1065 = vor.u32 1.1754944e-38, %v1064
        %v1066 = vsel %vm1063, %v1065, %v1061
        %v1067 = vmul.f32 %v796, %v1066
        %v1068 = vrcp.pop %v836
        %v1069 = vmul.f32 %v836, %v1068
        %v1070 = vsub.f32 1.0, %v1069
        %v1071 = vmul.f32 %v1068, %v1070
        %v1072 = vadd.f32 %v1068, %v1071
        %vm1073 = vweird.f32 %v836
        %vm1074 = vweird.f32 %v1068
        %vm1075 = vmor %vm1073, %vm1074
        %v1076 = vsel %vm1075, %v1068, %v1072
        %v1077 = vand.u32 2147483647, %v836
        %vm1078 = vcmp.eq.f32.partialorder %v1077, 8.507059e+37
        %v1079 = vand.u32 %v836, 2147483648
        %v1080 = vor.u32 1.1754944e-38, %v1079
        %v1081 = vsel %vm1078, %v1080, %v1076
        %v1082 = vmul.f32 %v798, %v1081
        %v1083 = vrcp.pop %v838
        %v1084 = vmul.f32 %v838, %v1083
        %v1085 = vsub.f32 1.0, %v1084
        %v1086 = vmul.f32 %v1083, %v1085
        %v1087 = vadd.f32 %v1083, %v1086
        %vm1088 = vweird.f32 %v838
        %vm1089 = vweird.f32 %v1083
        %vm1090 = vmor %vm1088, %vm1089
        %v1091 = vsel %vm1090, %v1083, %v1087
        %v1092 = vand.u32 2147483647, %v838
        %vm1093 = vcmp.eq.f32.partialorder %v1092, 8.507059e+37
        %v1094 = vand.u32 %v838, 2147483648
        %v1095 = vor.u32 1.1754944e-38, %v1094
        %v1096 = vsel %vm1093, %v1095, %v1091
        %v1097 = vmul.f32 %v800, %v1096
        %v1098 = vrcp.pop %v840
        %v1099 = vmul.f32 %v840, %v1098
        %v1100 = vsub.f32 1.0, %v1099
        %v1101 = vmul.f32 %v1098, %v1100
        %v1102 = vadd.f32 %v1098, %v1101
        %vm1103 = vweird.f32 %v840
        %vm1104 = vweird.f32 %v1098
        %vm1105 = vmor %vm1103, %vm1104
        %v1106 = vsel %vm1105, %v1098, %v1102
        %v1107 = vand.u32 2147483647, %v840
        %vm1108 = vcmp.eq.f32.partialorder %v1107, 8.507059e+37
        %v1109 = vand.u32 %v840, 2147483648
        %v1110 = vor.u32 1.1754944e-38, %v1109
        %v1111 = vsel %vm1108, %v1110, %v1106
        %v1112 = vmul.f32 %v802, %v1111
        %v1113 = vrcp.pop %v842
        %v1114 = vmul.f32 %v842, %v1113
        %v1115 = vsub.f32 1.0, %v1114
        %v1116 = vmul.f32 %v1113, %v1115
        %v1117 = vadd.f32 %v1113, %v1116
        %vm1118 = vweird.f32 %v842
        %vm1119 = vweird.f32 %v1113
        %vm1120 = vmor %vm1118, %vm1119
        %v1121 = vsel %vm1120, %v1113, %v1117
        %v1122 = vand.u32 2147483647, %v842
        %vm1123 = vcmp.eq.f32.partialorder %v1122, 8.507059e+37
        %v1124 = vand.u32 %v842, 2147483648
        %v1125 = vor.u32 1.1754944e-38, %v1124
        %v1126 = vsel %vm1123, %v1125, %v1121
        %v1127 = vmul.f32 %v804, %v1126
        %1128 = vst [vmem:[%s218] sm:$0xff] %v857
        %1129 = vst [vmem:[%s218 + $0x8] sm:$0xff] %v872
        %1130 = vst [vmem:[%s218 + $0x10] sm:$0xff] %v887
        %1131 = vst [vmem:[%s218 + $0x18] sm:$0xff] %v902
        %1132 = vst [vmem:[%s218 + $0x20] sm:$0xff] %v917
        %1133 = vst [vmem:[%s218 + $0x28] sm:$0xff] %v932
        %1134 = vst [vmem:[%s218 + $0x30] sm:$0xff] %v947
        %1135 = vst [vmem:[%s218 + $0x38] sm:$0xff] %v962
        %1136 = vst [vmem:[%s218 + $0x40] sm:$0xff] %v977
        %1137 = vst [vmem:[%s218 + $0x48] sm:$0xff] %v992
        %1138 = vst [vmem:[%s218 + $0x50] sm:$0xff] %v1007
        %1139 = vst [vmem:[%s218 + $0x58] sm:$0xff] %v1022
        %1140 = vst [vmem:[%s218 + $0x60] sm:$0xff] %v1037
        %1141 = vst [vmem:[%s218 + $0x68] sm:$0xff] %v1052
        %1142 = vst [vmem:[%s218 + $0x70] sm:$0xff] %v1067
        %1143 = vst [vmem:[%s218 + $0x78] sm:$0xff] %v1082
        %1144 = vst [vmem:[%s218 + $0x80] sm:$0xff] %v1097
        %1145 = vst [vmem:[%s218 + $0x88] sm:$0xff] %v1112
        %1146 = vst [vmem:[%s218 + $0x90] sm:$0xff] %v1127
        %s1147 = sand.u32 %s137, 1
        %s1148 = scalar_lea.sflag [#allocation3], %s1147
        %s1149 = sand.u32 %s137, 1
        %s1150 = smul.addr %s1149, 152
        %s1151 = scalar_lea.vmem [#allocation2], %s1150
        // Predicated region
        $region41: #{tpu_custom_call.1} parent=39 // pred_check
          %p1152 = pneg %p147
        $region42: #{tpu_custom_call.1} parent=39 // pred_check_branch
          %1154 = sbr.rel (%p1152) target = $region44
        $region43: #{tpu_custom_call.1} parent=39 // pred_region
          %s1155 = smul.u32 19, %s19
          %1157 = vsyncadd %s1148, 0
          %s1158 = smul.addr %s1155, 8
          %s1159 = scalar_lea.hbm %s5, %s1158
          %s1160 = sshll.u32 %s1151, 4
          %s1161 = int_to_ptr.vmem [resolvable:$true] %s1160
          %s1162 = sshll.u32 %s1159, 4
          %s1163 = int_to_ptr.hbm [resolvable:$true] %s1162
          %1168 = dma.vmem_to_hbm [thread:$0]  %s1161, 2432, %s1163, %s1148, 128, 128, 8
        $region44: #{tpu_custom_call.1} parent=39 // pred_fallthru
          _
      $region40: #{tpu_custom_call.1} parent=5 // pred_fallthru
        _
      %p1169 = scmp.le.s32.totalorder 2, %s14
      // Predicated region
      $region45: #{tpu_custom_call.1} parent=5 // pred_check
        %p1170 = pneg %p1169
      $region46: #{tpu_custom_call.1} parent=5 // pred_check_branch
        %1172 = sbr.rel (%p1170) target = $region48
      $region47: #{tpu_custom_call.1} parent=5 // pred_region
        %s1173 = ssub.s32 %s14, 2
        // Predicated region
        $region49: #{tpu_custom_call.1} parent=47 // pred_check
          %p1174 = pneg %p153
        $region50: #{tpu_custom_call.1} parent=47 // pred_check_branch
          %1176 = sbr.rel (%p1174) target = $region52
        $region51: #{tpu_custom_call.1} parent=47 // pred_region
          %s1177 = sand.u32 %s138, 1
          %s1178 = scalar_lea.sflag [#allocation3], %s1177
          %s1179 = sand.u32 %s138, 1
          %s1180 = smul.addr %s1179, 152
          %s1181 = scalar_lea.vmem [#allocation2], %s1180
          %1183 = dma.done %s1178, 2432
        $region52: #{tpu_custom_call.1} parent=47 // pred_fallthru
          _
      $region48: #{tpu_custom_call.1} parent=5 // pred_fallthru
        _
    $region6: #{tpu_custom_call.1} parent=1 // loop_footer
      %s18 = sadd.s32 1, %s14
    $region7: #{tpu_custom_call.1} parent=1 // loop_footer_branch
      %13 = sbr.rel target = $region3
    $region8: #{tpu_custom_call.1} parent=1 // loop_exit
      _
    %1184 = vsyncpa [#allocation3], 1
    %s1185 = scalar_lea.sflag [#allocation3], 1
    %1186 = vsyncpa %s1185, 1

</llo_original>
